<compile_context>
chip_gen: v6e
topology: v6e:2x2x1
jax: 0.10.0
libtpu: 0.0.40
codegen_flags: <defaults>
</compile_context>

<pallas_src>
import functools
import math

import jax
import jax.numpy as jnp
from jax.experimental import pallas as pl
from jax.experimental.pallas import tpu as pltpu

NEG_SLOPE = 0.01          # PyTorch nn.LeakyReLU default
_CONV_BATCH = 16          # samples per grid step in the conv path (16*8 = 128 lanes)


def _leaky_relu(x):
    return jnp.where(x >= 0, x, NEG_SLOPE * x)


def _pad8(n):
    return ((n + 7) // 8) * 8


def _zero_map(nd, *_):
    return (0,) * nd


def _full_spec(a):
    """Whole-array block, constant across the grid (weights / biases)."""
    return pl.BlockSpec(a.shape, functools.partial(_zero_map, a.ndim))


# ----------------------------------------------------------------------------
# MLP-only kernel (ifConv=False)
# ----------------------------------------------------------------------------
def _mlp_kernel(x_ref, w1_ref, b1_ref, w2_ref, b2_ref, w3_ref, b3_ref,
                w4_ref, b4_ref, o_ref):
    """Fused 4-layer MLP: (Linear + LeakyReLU) x3 + Linear (bf16 matmul, f32 acc)."""
    def dense(h, w_ref, b_ref, act):
        y = jnp.dot(h.astype(jnp.bfloat16), w_ref[...],
                    preferred_element_type=jnp.float32) + b_ref[...]
        return _leaky_relu(y) if act else y

    h = x_ref[...]
    h = dense(h, w1_ref, b1_ref, True)
    h = dense(h, w2_ref, b2_ref, True)
    h = dense(h, w3_ref, b3_ref, True)
    h = dense(h, w4_ref, b4_ref, False)
    o_ref[...] = h.astype(o_ref.dtype)


def _pallas_mlp(x, params):
    """x: (M, in_num) f32 -> (M, 128) f32 (padded output width, slice outside)."""
    (w1, b1), (w2, b2), (w3, b3), (w4, b4) = params
    M, K = x.shape
    NP = w4.shape[1]                     # 128 (lane-dense padded output)
    if M <= 128:
        bm = M                           # single block (== full dim, spec-legal)
    elif M <= 1024:
        bm = _pad8(pl.cdiv(M, 2))        # >=2 grid steps -> both v7x TCs get work
    else:
        bm = 512                         # big mem-bound tile (still tiny VMEM)
    grid = (pl.cdiv(M, bm),)

    args = (x, w1, b1, w2, b2, w3, b3, w4, b4)
    in_specs = [pl.BlockSpec((bm, K), lambda i: (i, 0))]
    in_specs += [_full_spec(a) for a in args[1:]]

    flops = 2 * M * (K * 128 + 128 * 128 + 128 * 64 + 64 * NP)
    bytes_accessed = 4 * M * (K + NP) + sum(
        int(a.size) * a.dtype.itemsize for a in args[1:])

    return pl.pallas_call(
        _mlp_kernel,
        out_shape=jax.ShapeDtypeStruct((M, NP), jnp.float32),
        grid=grid,
        in_specs=in_specs,
        out_specs=pl.BlockSpec((bm, NP), lambda i: (i, 0)),
        compiler_params=pltpu.CompilerParams(dimension_semantics=("parallel",)),
        cost_estimate=pl.CostEstimate(flops=int(flops), transcendentals=0,
                                      bytes_accessed=int(bytes_accessed)),
    )(*args)


# ----------------------------------------------------------------------------
# Fused conv-stack + MLP kernel (ifConv=True), B samples per grid step
# ----------------------------------------------------------------------------
def _conv_mlp_kernel(x_ref, c1w_ref, c1b_ref, c2w_ref, c2b_ref, c3w_ref, c3b_ref,
                     m1w_ref, m1b_ref, m2w_ref, m2b_ref, m3w_ref, m3b_ref,
                     m4w_ref, m4b_ref, o_ref,
                     h1_s, p1_s, h2_s, p2_s, h3_s,
                     *, B, Lc1, Lq1, Lc2, Lq2, Lc3p, Lf, st, RP2, RP3):
    f32, bf16 = jnp.float32, jnp.bfloat16
    W = B * 8                               # packed lane width, lane = b*8 + c

    # ---- conv1: 1 -> 8, k=4, s=2, p=2.  Input block is already zero-padded and
    # channel-replicated along lanes, so every tap is a full-width (lane-dense)
    # strided row read and the conv is 4 batched VPU broadcast-FMAs (kept f32).
    y1 = x_ref[pl.ds(0, Lc1, 2), :] * c1w_ref[0:1, :]
    for k in range(1, 4):
        y1 = y1 + x_ref[pl.ds(k, Lc1, 2), :] * c1w_ref[k:k + 1, :]
    h1_s[0:Lc1, :] = _leaky_relu(y1 + c1b_ref[...])

    # ---- maxpool1: k=8, s=4 (windows stay inside the valid Lc1 rows).
    m = h1_s[pl.ds(0, Lq1, 4), :]
    for j in range(1, 8):
        m = jnp.maximum(m, h1_s[pl.ds(j, Lq1, 4), :])
    # Zero only the pad/slack rows conv2 taps can read (no full-buffer sweep).
    p1_s[0:2, :] = jnp.zeros((2, W), f32)
    p1_s[2 + Lq1:RP2, :] = jnp.zeros((RP2 - 2 - Lq1, W), f32)
    p1_s[2:2 + Lq1, :] = m

    # ---- conv2: 8 -> 64, k=4, s=2, p=2.  Four taps fused into ONE MXU matmul:
    # per-sample im2col rows are assembled from 4 full-width strided reads.
    taps = [p1_s[pl.ds(k, Lc2, 2), :] for k in range(4)]            # 4 x (Lc2, W)
    lhs2 = jnp.concatenate(
        [jnp.concatenate([t[:, b * 8:(b + 1) * 8] for t in taps], axis=1)
         for b in range(B)], axis=0)                                 # (B*Lc2, 32)
    y2 = jnp.dot(lhs2.astype(bf16), c2w_ref[...], preferred_element_type=f32)
    h2_s[...] = _leaky_relu(y2 + c2b_ref[...])                       # (B*Lc2, 64)

    # ---- maxpool2: k=4, s=2, per sample; results go to per-sample padded p2_s.
    p2_s[...] = jnp.zeros(p2_s.shape, f32)      # small buffer: pad + slack rows
    for b in range(B):
        r0 = b * Lc2
        mb = h2_s[pl.ds(r0, Lq2, 2), :]
        for j in range(1, 4):
            mb = jnp.maximum(mb, h2_s[pl.ds(r0 + j, Lq2, 2), :])
        p2_s[b * RP3 + 2:b * RP3 + 2 + Lq2, :] = mb

    # ---- conv3: 64 -> 256, k=4, s=2, p=2.  Taps fused -> single matmul with
    # K = 256 (matches v6e/v7x MXU depth).
    lhs3 = jnp.concatenate(
        [jnp.concatenate([p2_s[pl.ds(b * RP3 + k, Lc3p, 2), :] for k in range(4)],
                         axis=1)
         for b in range(B)], axis=0)                                 # (B*Lc3p, 256)
    y3 = jnp.dot(lhs3.astype(bf16), c3w_ref[...], preferred_element_type=f32)
    h3_s[...] = _leaky_relu(y3 + c3b_ref[...])                       # (B*Lc3p, 256)

    # ---- maxpool3 (k=4, s=st) + torch channel-major flatten folded into m1w,
    # then the fused 4-layer MLP on the (B, .) batch tile.
    acc = jnp.zeros((B, 128), f32)
    for l in range(Lf):
        mp = h3_s[pl.ds(l * st, B, stride=Lc3p), :]        # (B, 256): row l*st+j of
        for j in range(1, 4):                              # every sample in one read
            mp = jnp.maximum(mp, h3_s[pl.ds(l * st + j, B, stride=Lc3p), :])
        acc = acc + jnp.dot(mp.astype(bf16), m1w_ref[l],
                            preferred_element_type=f32)
    h = _leaky_relu(acc + m1b_ref[...])
    h = _leaky_relu(jnp.dot(h.astype(bf16), m2w_ref[...],
                            preferred_element_type=f32) + m2b_ref[...])
    h = _leaky_relu(jnp.dot(h.astype(bf16), m3w_ref[...],
                            preferred_element_type=f32) + m3b_ref[...])
    h = jnp.dot(h.astype(bf16), m4w_ref[...],
                preferred_element_type=f32) + m4b_ref[...]
    o_ref[...] = h.astype(o_ref.dtype)                     # (B, 128) lane-dense store


def _fused_conv_mlp(x, conv_p, mlp_p, st, in_num, B=_CONV_BATCH):
    """x: (N, 1, L) f32 -> (N, 128) f32 (padded output width, slice outside)."""
    N, C, L = x.shape
    assert C == 1, "conv path expects a single input channel"

    # Static geometry of the conv/pool stack (stride-2 convs, pad=2, k=4).
    Lc1 = (L + 4 - 4) // 2 + 1
    Lq1 = (Lc1 - 8) // 4 + 1
    Lc2 = (Lq1 + 4 - 4) // 2 + 1
    Lq2 = (Lc2 - 4) // 2 + 1
    Lc3 = (Lq2 + 4 - 4) // 2 + 1
    Lf = (Lc3 - 4) // st + 1
    assert Lf * 256 == in_num, (Lf, in_num)
    assert Lc2 % 8 == 0, Lc2            # holds for in_num in {256, 512, 1024}
    Lc3p = _pad8(Lc3)                   # pad conv3 rows so per-sample blocks align
    RP2 = _pad8(2 * Lc2 + 2)            # p1_s rows (covers every conv2 tap read)
    RP3 = _pad8(2 * Lc3p + 2)           # per-sample row stride in p2_s
    Lp1r = _pad8(L + 4)

    (c1w, c1b), (c2w, c2b), (c3w, c3b) = conv_p
    (m1w, m1b), (m2w, m2b), (m3w, m3b), (m4w, m4b) = mlp_p

    # Batch-pad to a multiple of B, replicate the single input channel 8x along
    # lanes and zero-pad the length dim once in XLA, so every grid step's input
    # DMA is one lane-dense (Lp1r, B*8) slab and the kernel needs no stage-0 fill.
    Np = ((N + B - 1) // B) * B
    x2 = x.reshape(N, L).astype(jnp.float32)
    if Np > N:
        x2 = jnp.concatenate([x2, jnp.zeros((Np - N, L), jnp.float32)], axis=0)
    xr = jnp.repeat(x2, 8, axis=0).T                 # (L, Np*8): col n*8+c = x[n]
    xr = jnp.pad(xr, ((2, Lp1r - L - 2), (0, 0)))    # conv1 zero padding (p=2)

    kernel = functools.partial(
        _conv_mlp_kernel, B=B, Lc1=Lc1, Lq1=Lq1, Lc2=Lc2, Lq2=Lq2,
        Lc3p=Lc3p, Lf=Lf, st=st, RP2=RP2, RP3=RP3)

    args = (xr, c1w, c1b, c2w, c2b, c3w, c3b,
            m1w, m1b, m2w, m2b, m3w, m3b, m4w, m4b)
    in_specs = [pl.BlockSpec((Lp1r, B * 8), lambda i: (0, i))]
    in_specs += [_full_spec(a) for a in args[1:]]

    scratch_shapes = [
        pltpu.VMEM((_pad8(Lc1), B * 8), jnp.float32),    # conv1 out (lane-packed)
        pltpu.VMEM((RP2, B * 8), jnp.float32),           # padded pool1 (lane-packed)
        pltpu.VMEM((B * Lc2, 64), jnp.float32),          # conv2 out (sample-major rows)
        pltpu.VMEM((B * RP3, 64), jnp.float32),          # padded pool2 (sample-major)
        pltpu.VMEM((B * Lc3p, 256), jnp.float32),        # conv3 out (sample-major)
    ]

    flops = 2 * Np * (Lc1 * 4 * 8 + Lc2 * 32 * 64 + Lc3p * 256 * 256
                      + in_num * 128 + 128 * 128 + 128 * 64 + 64 * 128)
    bytes_accessed = int(xr.size) * 4 + Np * 128 * 4 + sum(
        int(a.size) * a.dtype.itemsize for a in args[1:])

    out = pl.pallas_call(
        kernel,
        out_shape=jax.ShapeDtypeStruct((Np, 128), jnp.float32),
        grid=(Np // B,),
        in_specs=in_specs,
        out_specs=pl.BlockSpec((B, 128), lambda i: (i, 0)),
        scratch_shapes=scratch_shapes,
        compiler_params=pltpu.CompilerParams(dimension_semantics=("parallel",)),
        cost_estimate=pl.CostEstimate(flops=int(flops), transcendentals=0,
                                      bytes_accessed=int(bytes_accessed)),
    )(*args)
    return out[:N]


# ----------------------------------------------------------------------------
# Module equivalent
# ----------------------------------------------------------------------------
def _uniform_init(key, shape, fan_in):
    bound = 1.0 / math.sqrt(fan_in)
    return jax.random.uniform(key, shape, jnp.float32, -bound, bound)


class CNNPallas:
    def __init__(self, in_num, out_num, ifConv=False, key=None):
        self.ifConv = ifConv
        self.in_num = in_num
        self.out_num = out_num
        st = 4
        if in_num == 1024:
            st = 4
        if in_num == 256:
            st = 2
        elif in_num == 512:
            st = 4
        self.st = st

        if key is None:
            key = jax.random.PRNGKey(0)
        keys = jax.random.split(key, 14)
        ki = 0

        # Master f32 params, PyTorch layout: Conv1d (out_ch, in_ch, k), Linear (in, out).
        self.conv_params = []
        for (o, c, k) in [(8, 1, 4), (64, 8, 4), (256, 64, 4)]:
            fan = c * k
            w = _uniform_init(keys[ki], (o, c, k), fan); ki += 1
            b = _uniform_init(keys[ki], (o,), fan); ki += 1
            self.conv_params.append((w, b))

        self.mlp_params = []
        for (fi, fo) in [(in_num, 128), (128, 128), (128, 64), (64, out_num)]:
            w = _uniform_init(keys[ki], (fi, fo), fi); ki += 1
            b = _uniform_init(keys[ki], (fo,), fi); ki += 1
            self.mlp_params.append((w, b))

        self._prep_kernel_params()

    def _prep_kernel_params(self):
        bf16 = jnp.bfloat16
        B = _CONV_BATCH
        (w1, b1), (w2, b2), (w3, b3) = self.conv_params
        # conv1: (4, 8) [k, c], tiled B times along lanes to match the packed
        # (b*8+c) lane layout; stays f32 (VPU path).
        # conv2/conv3: taps-major im2col weights (k*C_in + c_in, C_out), bf16.
        self._conv_prepped = [
            (jnp.tile(jnp.transpose(w1[:, 0, :], (1, 0)), (1, B)),        # (4, B*8)
             jnp.tile(b1.reshape(1, 8), (1, B))),                          # (1, B*8)
            (jnp.transpose(w2, (2, 1, 0)).reshape(32, 64).astype(bf16),    # (32, 64)
             b2.reshape(1, -1)),
            (jnp.transpose(w3, (2, 1, 0)).reshape(256, 256).astype(bf16),  # (256, 256)
             b3.reshape(1, -1)),
        ]

        (m1w, m1b), (m2w, m2b), (m3w, m3b), (m4w, m4b) = self.mlp_params
        # Final layer padded to a 128-lane slab (lane-dense store; sliced in wrapper).
        m4w_p = jnp.zeros((m4w.shape[0], 128), jnp.float32).at[:, :self.out_num].set(m4w)
        m4b_p = jnp.zeros((1, 128), jnp.float32).at[:, :self.out_num].set(m4b.reshape(1, -1))
        self._mlp_prepped = [
            (m1w.astype(bf16), m1b.reshape(1, -1)),
            (m2w.astype(bf16), m2b.reshape(1, -1)),
            (m3w.astype(bf16), m3b.reshape(1, -1)),
            (m4w_p.astype(bf16), m4b_p),
        ]

        if self.ifConv:
            assert self.in_num % 256 == 0
            Lf = self.in_num // 256
            # Fold torch's channel-major flatten of the (256, Lf) conv output into
            # the first MLP weight: m1w_perm[l, c, :] = m1w[c * Lf + l, :].
            m1w_perm = m1w.reshape(256, Lf, 128).transpose(1, 0, 2).astype(bf16)
            self._mlp_prepped_conv = [(m1w_perm, m1b.reshape(1, -1))] + self._mlp_prepped[1:]

    def __call__(self, x):
        if self.ifConv:
            y = _fused_conv_mlp(x, self._conv_prepped, self._mlp_prepped_conv,
                                self.st, self.in_num)
        else:
            y = _pallas_mlp(x.reshape(-1, self.in_num), self._mlp_prepped)
        return y[:, :self.out_num].reshape(-1, self.out_num)


# ----------------------------------------------------------------------------
# Pure-JAX reference (f32, with the same bf16 weight rounding the kernels use)
# ----------------------------------------------------------------------------
def _qbf16(w):
    return w.astype(jnp.bfloat16).astype(jnp.float32)


def _ref_forward(model, x):
    if model.ifConv:
        pools = [(8, 4), (4, 2), (4, model.st)]
        quant = [False, True, True]   # kernel keeps conv1 f32, conv2/3 bf16
        for (w, b), (pk, ps), q in zip(model.conv_params, pools, quant):
            wq = _qbf16(w) if q else w
            x = jax.lax.conv_general_dilated(
                x, wq, window_strides=(2,), padding=[(2, 2)],
                dimension_numbers=("NCH", "OIH", "NCH"))
            x = _leaky_relu(x + b[None, :, None])
            x = jax.lax.reduce_window(x, -jnp.inf, jax.lax.max,
                                      (1, 1, pk), (1, 1, ps), "VALID")
        x = x.reshape(-1, model.in_num)
    for i, (w, b) in enumerate(model.mlp_params):
        x = x @ _qbf16(w) + b
        if i < 3:
            x = _leaky_relu(x)
    return x.reshape(-1, model.out_num)


if __name__ == "__main__":
    key = jax.random.PRNGKey(0)
    k_m1, k_m2, k_x1, k_x2 = jax.random.split(key, 4)

    # Case 1: default forward (ifConv=False) -> fused MLP only.
    # x1 is (batch=2, in_num=256).
    model1 = CNNPallas(in_num=256, out_num=10, ifConv=False, key=k_m1)
    x1 = jax.random.normal(k_x1, (2, 256), jnp.float32)
    y1 = model1(x1)
    jax.block_until_ready(y1)
    r1 = _ref_forward(model1, x1)
    assert y1.shape == (2, 10), y1.shape
    assert jnp.allclose(y1, r1, atol=2e-2, rtol=2e-2), "MLP path mismatch"

    # Case 2: conv feature extractor (ifConv=True), fully fused batched kernel.
    # x2 is (batch=2, channels=1, length=256) NCL; conv stack flattens to in_num=256.
    model2 = CNNPallas(in_num=256, out_num=5, ifConv=True, key=k_m2)
    x2 = jax.random.normal(k_x2, (2, 1, 256), jnp.float32)
    y2 = model2(x2)
    jax.block_until_ready(y2)
    r2 = _ref_forward(model2, x2)
    assert y2.shape == (2, 5), y2.shape
    assert jnp.allclose(y2, r2, atol=2e-2, rtol=2e-2), "Conv path mismatch"

    print("KERNEL_OK")
</pallas_src>

<mosaic_0001>
module attributes {stable_mosaic.version = 11 : i64} {
  func.func @_mlp_kernel(%arg0: i32, %arg1: memref<2x256xf32, #tpu.memory_space<vmem>>, %arg2: memref<256x128xbf16, #tpu.memory_space<vmem>>, %arg3: memref<1x128xf32, #tpu.memory_space<vmem>>, %arg4: memref<128x128xbf16, #tpu.memory_space<vmem>>, %arg5: memref<1x128xf32, #tpu.memory_space<vmem>>, %arg6: memref<128x64xbf16, #tpu.memory_space<vmem>>, %arg7: memref<1x64xf32, #tpu.memory_space<vmem>>, %arg8: memref<64x128xbf16, #tpu.memory_space<vmem>>, %arg9: memref<1x128xf32, #tpu.memory_space<vmem>>, %arg10: memref<2x128xf32, #tpu.memory_space<vmem>>) attributes {dimension_semantics = [#tpu.dimension_semantics<parallel>], iteration_bounds = array<i64: 1>, scalar_prefetch = 0 : i64, scratch_operands = 0 : i64, tpu.core_type = #tpu.core_type<tc>, window_params = [{transform_indices = @transform_0, window_bounds = array<i64: 2, 256>}, {pipeline_mode = #tpu.pipeline_mode<synchronous>, transform_indices = @transform_1, window_bounds = array<i64: 256, 128>}, {pipeline_mode = #tpu.pipeline_mode<synchronous>, transform_indices = @transform_2, window_bounds = array<i64: 1, 128>}, {pipeline_mode = #tpu.pipeline_mode<synchronous>, transform_indices = @transform_3, window_bounds = array<i64: 128, 128>}, {pipeline_mode = #tpu.pipeline_mode<synchronous>, transform_indices = @transform_4, window_bounds = array<i64: 1, 128>}, {pipeline_mode = #tpu.pipeline_mode<synchronous>, transform_indices = @transform_5, window_bounds = array<i64: 128, 64>}, {pipeline_mode = #tpu.pipeline_mode<synchronous>, transform_indices = @transform_6, window_bounds = array<i64: 1, 64>}, {pipeline_mode = #tpu.pipeline_mode<synchronous>, transform_indices = @transform_7, window_bounds = array<i64: 64, 128>}, {pipeline_mode = #tpu.pipeline_mode<synchronous>, transform_indices = @transform_8, window_bounds = array<i64: 1, 128>}, {transform_indices = @transform_9, window_bounds = array<i64: 2, 128>}]} {
    %c0 = arith.constant 0 : index
    %c0_0 = arith.constant 0 : index
    %0 = vector.load %arg1[%c0, %c0_0] : memref<2x256xf32, #tpu.memory_space<vmem>>, vector<2x256xf32>
    %1 = arith.truncf %0 : vector<2x256xf32> to vector<2x256xbf16>
    %c0_1 = arith.constant 0 : index
    %c0_2 = arith.constant 0 : index
    %2 = vector.load %arg2[%c0_1, %c0_2] : memref<256x128xbf16, #tpu.memory_space<vmem>>, vector<256x128xbf16>
    %cst = arith.constant dense<0.000000e+00> : vector<2x128xf32>
    %3 = tpu.matmul %1, %2, %cst {dimension_numbers = #tpu.dot_dimension_numbers<[1], [0], [0], [1], [0, 0, 1, 1], [], []>} : vector<2x256xbf16>, vector<256x128xbf16>, vector<2x128xf32> -> vector<2x128xf32>
    %c0_3 = arith.constant 0 : index
    %c0_4 = arith.constant 0 : index
    %4 = vector.load %arg3[%c0_3, %c0_4] : memref<1x128xf32, #tpu.memory_space<vmem>>, vector<1x128xf32>
    %5 = vector.broadcast %4 : vector<1x128xf32> to vector<2x128xf32>
    %6 = arith.addf %3, %5 : vector<2x128xf32>
    %cst_5 = arith.constant 0.000000e+00 : f32
    %7 = vector.broadcast %cst_5 : f32 to vector<2x128xf32>
    %8 = arith.cmpf oge, %6, %7 : vector<2x128xf32>
    %cst_6 = arith.constant 0.00999999977 : f32
    %9 = vector.broadcast %cst_6 : f32 to vector<2x128xf32>
    %10 = arith.mulf %9, %6 : vector<2x128xf32>
    %11 = arith.select %8, %6, %10 : vector<2x128xi1>, vector<2x128xf32>
    %12 = arith.truncf %11 : vector<2x128xf32> to vector<2x128xbf16>
    %c0_7 = arith.constant 0 : index
    %c0_8 = arith.constant 0 : index
    %13 = vector.load %arg4[%c0_7, %c0_8] : memref<128x128xbf16, #tpu.memory_space<vmem>>, vector<128x128xbf16>
    %cst_9 = arith.constant dense<0.000000e+00> : vector<2x128xf32>
    %14 = tpu.matmul %12, %13, %cst_9 {dimension_numbers = #tpu.dot_dimension_numbers<[1], [0], [0], [1], [0, 0, 1, 1], [], []>} : vector<2x128xbf16>, vector<128x128xbf16>, vector<2x128xf32> -> vector<2x128xf32>
    %c0_10 = arith.constant 0 : index
    %c0_11 = arith.constant 0 : index
    %15 = vector.load %arg5[%c0_10, %c0_11] : memref<1x128xf32, #tpu.memory_space<vmem>>, vector<1x128xf32>
    %16 = vector.broadcast %15 : vector<1x128xf32> to vector<2x128xf32>
    %17 = arith.addf %14, %16 : vector<2x128xf32>
    %cst_12 = arith.constant 0.000000e+00 : f32
    %18 = vector.broadcast %cst_12 : f32 to vector<2x128xf32>
    %19 = arith.cmpf oge, %17, %18 : vector<2x128xf32>
    %cst_13 = arith.constant 0.00999999977 : f32
    %20 = vector.broadcast %cst_13 : f32 to vector<2x128xf32>
    %21 = arith.mulf %20, %17 : vector<2x128xf32>
    %22 = arith.select %19, %17, %21 : vector<2x128xi1>, vector<2x128xf32>
    %23 = arith.truncf %22 : vector<2x128xf32> to vector<2x128xbf16>
    %c0_14 = arith.constant 0 : index
    %c0_15 = arith.constant 0 : index
    %24 = vector.load %arg6[%c0_14, %c0_15] : memref<128x64xbf16, #tpu.memory_space<vmem>>, vector<128x64xbf16>
    %cst_16 = arith.constant dense<0.000000e+00> : vector<2x64xf32>
    %25 = tpu.matmul %23, %24, %cst_16 {dimension_numbers = #tpu.dot_dimension_numbers<[1], [0], [0], [1], [0, 0, 1, 1], [], []>} : vector<2x128xbf16>, vector<128x64xbf16>, vector<2x64xf32> -> vector<2x64xf32>
    %c0_17 = arith.constant 0 : index
    %c0_18 = arith.constant 0 : index
    %26 = vector.load %arg7[%c0_17, %c0_18] : memref<1x64xf32, #tpu.memory_space<vmem>>, vector<1x64xf32>
    %27 = vector.broadcast %26 : vector<1x64xf32> to vector<2x64xf32>
    %28 = arith.addf %25, %27 : vector<2x64xf32>
    %cst_19 = arith.constant 0.000000e+00 : f32
    %29 = vector.broadcast %cst_19 : f32 to vector<2x64xf32>
    %30 = arith.cmpf oge, %28, %29 : vector<2x64xf32>
    %cst_20 = arith.constant 0.00999999977 : f32
    %31 = vector.broadcast %cst_20 : f32 to vector<2x64xf32>
    %32 = arith.mulf %31, %28 : vector<2x64xf32>
    %33 = arith.select %30, %28, %32 : vector<2x64xi1>, vector<2x64xf32>
    %34 = arith.truncf %33 : vector<2x64xf32> to vector<2x64xbf16>
    %c0_21 = arith.constant 0 : index
    %c0_22 = arith.constant 0 : index
    %35 = vector.load %arg8[%c0_21, %c0_22] : memref<64x128xbf16, #tpu.memory_space<vmem>>, vector<64x128xbf16>
    %cst_23 = arith.constant dense<0.000000e+00> : vector<2x128xf32>
    %36 = tpu.matmul %34, %35, %cst_23 {dimension_numbers = #tpu.dot_dimension_numbers<[1], [0], [0], [1], [0, 0, 1, 1], [], []>} : vector<2x64xbf16>, vector<64x128xbf16>, vector<2x128xf32> -> vector<2x128xf32>
    %c0_24 = arith.constant 0 : index
    %c0_25 = arith.constant 0 : index
    %37 = vector.load %arg9[%c0_24, %c0_25] : memref<1x128xf32, #tpu.memory_space<vmem>>, vector<1x128xf32>
    %38 = vector.broadcast %37 : vector<1x128xf32> to vector<2x128xf32>
    %39 = arith.addf %36, %38 : vector<2x128xf32>
    %c0_26 = arith.constant 0 : index
    %c0_27 = arith.constant 0 : index
    %40 = vector.load %arg10[%c0_26, %c0_27] : memref<2x128xf32, #tpu.memory_space<vmem>>, vector<2x128xf32>
    tpu.vector_store %arg10[%c0_26, %c0_27], %39 {strides = array<i32>} : memref<2x128xf32, #tpu.memory_space<vmem>>, vector<2x128xf32>,
    return
  }
  func.func @transform_0(%arg0: i32) -> (i32, i32) {
    %c0_i32 = arith.constant 0 : i32
    %c0_i32_0 = arith.constant 0 : i32
    return %arg0, %c0_i32 : i32, i32
  }
  func.func @transform_1(%arg0: i32) -> (i32, i32) {
    %c0_i32 = arith.constant 0 : i32
    %c0_i32_0 = arith.constant 0 : i32
    %c0_i32_1 = arith.constant 0 : i32
    return %c0_i32, %c0_i32_0 : i32, i32
  }
  func.func @transform_2(%arg0: i32) -> (i32, i32) {
    %c0_i32 = arith.constant 0 : i32
    %c0_i32_0 = arith.constant 0 : i32
    %c0_i32_1 = arith.constant 0 : i32
    return %c0_i32, %c0_i32_0 : i32, i32
  }
  func.func @transform_3(%arg0: i32) -> (i32, i32) {
    %c0_i32 = arith.constant 0 : i32
    %c0_i32_0 = arith.constant 0 : i32
    %c0_i32_1 = arith.constant 0 : i32
    return %c0_i32, %c0_i32_0 : i32, i32
  }
  func.func @transform_4(%arg0: i32) -> (i32, i32) {
    %c0_i32 = arith.constant 0 : i32
    %c0_i32_0 = arith.constant 0 : i32
    %c0_i32_1 = arith.constant 0 : i32
    return %c0_i32, %c0_i32_0 : i32, i32
  }
  func.func @transform_5(%arg0: i32) -> (i32, i32) {
    %c0_i32 = arith.constant 0 : i32
    %c0_i32_0 = arith.constant 0 : i32
    %c0_i32_1 = arith.constant 0 : i32
    return %c0_i32, %c0_i32_0 : i32, i32
  }
  func.func @transform_6(%arg0: i32) -> (i32, i32) {
    %c0_i32 = arith.constant 0 : i32
    %c0_i32_0 = arith.constant 0 : i32
    %c0_i32_1 = arith.constant 0 : i32
    return %c0_i32, %c0_i32_0 : i32, i32
  }
  func.func @transform_7(%arg0: i32) -> (i32, i32) {
    %c0_i32 = arith.constant 0 : i32
    %c0_i32_0 = arith.constant 0 : i32
    %c0_i32_1 = arith.constant 0 : i32
    return %c0_i32, %c0_i32_0 : i32, i32
  }
  func.func @transform_8(%arg0: i32) -> (i32, i32) {
    %c0_i32 = arith.constant 0 : i32
    %c0_i32_0 = arith.constant 0 : i32
    %c0_i32_1 = arith.constant 0 : i32
    return %c0_i32, %c0_i32_0 : i32, i32
  }
  func.func @transform_9(%arg0: i32) -> (i32, i32) {
    %c0_i32 = arith.constant 0 : i32
    %c0_i32_0 = arith.constant 0 : i32
    return %arg0, %c0_i32 : i32, i32
  }
}

</mosaic_0001>

<llo_original>
// kernel: tpu_custom_call.1
$region0: #{tpu_custom_call.1}
  #allocation0 [shape = 'u32[]', space=smem, size = 0x4, offset = 0x4, fixed_abs, tag = 'smem constant byte address 0x4 - core index']
  #allocation1 [shape = 'u32[144,128]{1,0:T(1,128)}', space=vmem, size = 0x12000, scoped, tag = 'internal scratch']
  %s0 = inlined_call_operand.vmem [shape: f32[2,256], index: 0, kind: input, shape index: {}]
  %s1 = inlined_call_operand.hbm [shape: bf16[256,128], index: 1, kind: input, shape index: {}]
  %s2 = inlined_call_operand.vmem [shape: f32[1,128], index: 2, kind: input, shape index: {}]
  %s3 = inlined_call_operand.vmem [shape: bf16[128,128], index: 3, kind: input, shape index: {}]
  %s4 = inlined_call_operand.vmem [shape: f32[1,128], index: 4, kind: input, shape index: {}]
  %s5 = inlined_call_operand.vmem [shape: bf16[128,64], index: 5, kind: input, shape index: {}]
  %s6 = inlined_call_operand.vmem [shape: f32[1,64], index: 6, kind: input, shape index: {}]
  %s7 = inlined_call_operand.vmem [shape: bf16[64,128], index: 7, kind: input, shape index: {}]
  %s8 = inlined_call_operand.vmem [shape: f32[1,128], index: 8, kind: input, shape index: {}]
  %s9 = inlined_call_operand.hbm [shape: f32[2,128], index: 9, kind: output, shape index: {}]
  %s10 = sld [smem:[#allocation0]]
  $region50: #{tpu_custom_call.1} parent=0
    _
  %s12 = ssub.s32 1, %s10
  %s13 = scalar_select 0, %s12, %s10
  $region1: #{tpu_custom_call.1} parent=0
    #allocation2 [shape = 'u8[65536]{0}', space=vmem, size = 0x10000, scoped, tag = 'input window, operand 1, single buffered']
    #allocation3 [shape = 's32[1]{0}', space=sflag, size = 0x4, scoped, tag = 'scoped memory for tpu_custom_call.1']
    #allocation4 [shape = 's32[1]{0}', space=sflag, size = 0x4, scoped, tag = 'scoped memory for tpu_custom_call.1']
    #allocation5 [shape = 'u8[1024]{0}', space=vmem, size = 0x400, scoped, tag = 'output window, operand 0, single buffered']
    %14 = vsyncpa [#allocation3], 0
    %15 = vsyncpa [#allocation4], 0
    // Predicated region
    $region2: #{tpu_custom_call.1} parent=1 // pred_check
      _
    $region3: #{tpu_custom_call.1} parent=1 // pred_check_branch
      %17 = sbr.rel (0) target = $region5
    $region4: #{tpu_custom_call.1} parent=1 // pred_region
      _
    $region5: #{tpu_custom_call.1} parent=1 // pred_fallthru
      _
    // Predicated region
    $region6: #{tpu_custom_call.1} parent=1 // pred_check
      _
    $region7: #{tpu_custom_call.1} parent=1 // pred_check_branch
      %19 = sbr.rel (0) target = $region9
    $region8: #{tpu_custom_call.1} parent=1 // pred_region
      %s21 = ssub.s32 2048, 2048
      %22 = vsyncadd [#allocation3], %s21
      %s23 = sshll.u32 [#allocation2], 4
      %s24 = int_to_ptr.vmem [resolvable:$true] %s23
      %29 = dma.hbm_to_vmem [thread:$0]  %s1, 2048, %s24, [#allocation3], 64, 64, 4
    $region9: #{tpu_custom_call.1} parent=1 // pred_fallthru
      _
    // Predicated region
    $region10: #{tpu_custom_call.1} parent=1 // pred_check
      _
    $region11: #{tpu_custom_call.1} parent=1 // pred_check_branch
      %31 = sbr.rel (0) target = $region13
    $region12: #{tpu_custom_call.1} parent=1 // pred_region
      _
    $region13: #{tpu_custom_call.1} parent=1 // pred_fallthru
      _
    // Predicated region
    $region14: #{tpu_custom_call.1} parent=1 // pred_check
      _
    $region15: #{tpu_custom_call.1} parent=1 // pred_check_branch
      %33 = sbr.rel (0) target = $region17
    $region16: #{tpu_custom_call.1} parent=1 // pred_region
      _
    $region17: #{tpu_custom_call.1} parent=1 // pred_fallthru
      _
    // Predicated region
    $region18: #{tpu_custom_call.1} parent=1 // pred_check
      _
    $region19: #{tpu_custom_call.1} parent=1 // pred_check_branch
      %35 = sbr.rel (0) target = $region21
    $region20: #{tpu_custom_call.1} parent=1 // pred_region
      _
    $region21: #{tpu_custom_call.1} parent=1 // pred_fallthru
      _
    // Predicated region
    $region22: #{tpu_custom_call.1} parent=1 // pred_check
      _
    $region23: #{tpu_custom_call.1} parent=1 // pred_check_branch
      %37 = sbr.rel (0) target = $region25
    $region24: #{tpu_custom_call.1} parent=1 // pred_region
      _
    $region25: #{tpu_custom_call.1} parent=1 // pred_fallthru
      _
    // Predicated region
    $region26: #{tpu_custom_call.1} parent=1 // pred_check
      _
    $region27: #{tpu_custom_call.1} parent=1 // pred_check_branch
      %39 = sbr.rel (0) target = $region29
    $region28: #{tpu_custom_call.1} parent=1 // pred_region
      _
    $region29: #{tpu_custom_call.1} parent=1 // pred_fallthru
      _
    // Predicated region
    $region30: #{tpu_custom_call.1} parent=1 // pred_check
      _
    $region31: #{tpu_custom_call.1} parent=1 // pred_check_branch
      %41 = sbr.rel (0) target = $region33
    $region32: #{tpu_custom_call.1} parent=1 // pred_region
      _
    $region33: #{tpu_custom_call.1} parent=1 // pred_fallthru
      _
    // Predicated region
    $region34: #{tpu_custom_call.1} parent=1 // pred_check
      _
    $region35: #{tpu_custom_call.1} parent=1 // pred_check_branch
      %43 = sbr.rel (0) target = $region37
    $region36: #{tpu_custom_call.1} parent=1 // pred_region
      _
    $region37: #{tpu_custom_call.1} parent=1 // pred_fallthru
      _
    // Predicated region
    $region38: #{tpu_custom_call.1} parent=1 // pred_check
      _
    $region39: #{tpu_custom_call.1} parent=1 // pred_check_branch
      %45 = sbr.rel (0) target = $region41
    $region40: #{tpu_custom_call.1} parent=1 // pred_region
      %46 = dma.done [#allocation3], 2048
    $region41: #{tpu_custom_call.1} parent=1 // pred_fallthru
      _
    %v48 = vld [vmem:[%s0] sm:$0xf]
    %v51 = vunpack.c.l.s4 1983009808
    %v52 = vunpack.c.0.s8 %v51
    %v53 = vlaneseq
    %v54 = vshrl.u32 %v53, 7
    %v55 = vsub.s32 %v52, %v54
    %v56 = vrot.slane %v48, %v55
    %v57 = vcombine.high %v56, %v56
    %v60 = vpack.c.bf16 %v56, %v56
    %v61 = vpack.c.bf16 %v57, %v57
    %v62 = vld [vmem:[#allocation2] sm:$0xf]
    %v63 = vld [vmem:[#allocation2 + $0x4] sm:$0xf]
    %v64 = vld [vmem:[#allocation2 + $0x8] sm:$0xf]
    %v65 = vld [vmem:[#allocation2 + $0xc] sm:$0xf]
    %v66 = vld [vmem:[#allocation2 + $0x10] sm:$0xf]
    %v67 = vld [vmem:[#allocation2 + $0x14] sm:$0xf]
    %v68 = vld [vmem:[#allocation2 + $0x18] sm:$0xf]
    %v69 = vld [vmem:[#allocation2 + $0x1c] sm:$0xf]
    %v70 = vld [vmem:[#allocation2 + $0x20] sm:$0xf]
    %v71 = vld [vmem:[#allocation2 + $0x24] sm:$0xf]
    %v72 = vld [vmem:[#allocation2 + $0x28] sm:$0xf]
    %v73 = vld [vmem:[#allocation2 + $0x2c] sm:$0xf]
    %v74 = vld [vmem:[#allocation2 + $0x30] sm:$0xf]
    %v75 = vld [vmem:[#allocation2 + $0x34] sm:$0xf]
    %v76 = vld [vmem:[#allocation2 + $0x38] sm:$0xf]
    %v77 = vld [vmem:[#allocation2 + $0x3c] sm:$0xf]
    %v78 = vld [vmem:[#allocation2 + $0x40] sm:$0xf]
    %v79 = vld [vmem:[#allocation2 + $0x44] sm:$0xf]
    %v80 = vld [vmem:[#allocation2 + $0x48] sm:$0xf]
    %v81 = vld [vmem:[#allocation2 + $0x4c] sm:$0xf]
    %v82 = vld [vmem:[#allocation2 + $0x50] sm:$0xf]
    %v83 = vld [vmem:[#allocation2 + $0x54] sm:$0xf]
    %v84 = vld [vmem:[#allocation2 + $0x58] sm:$0xf]
    %v85 = vld [vmem:[#allocation2 + $0x5c] sm:$0xf]
    %v86 = vld [vmem:[#allocation2 + $0x60] sm:$0xf]
    %v87 = vld [vmem:[#allocation2 + $0x64] sm:$0xf]
    %v88 = vld [vmem:[#allocation2 + $0x68] sm:$0xf]
    %v89 = vld [vmem:[#allocation2 + $0x6c] sm:$0xf]
    %v90 = vld [vmem:[#allocation2 + $0x70] sm:$0xf]
    %v91 = vld [vmem:[#allocation2 + $0x74] sm:$0xf]
    %v92 = vld [vmem:[#allocation2 + $0x78] sm:$0xf]
    %v93 = vld [vmem:[#allocation2 + $0x7c] sm:$0xf]
    %v94 = vld [vmem:[%s2] sm:$0x1]
    %v96 = vlaneseq
    %v97 = vshrl.u32 %v96, 7
    %v98 = vsub.s32 0, %v97
    %v99 = vrot.slane %v94, %v98
    %v133 = vunpack.c.l.b16 %v62
    %v134 = vunpack.c.l.b16 %v63
    %v135 = vunpack.c.l.b16 %v64
    %v136 = vunpack.c.l.b16 %v65
    %v137 = vunpack.c.l.b16 %v66
    %v138 = vunpack.c.l.b16 %v67
    %v139 = vunpack.c.l.b16 %v68
    %v140 = vunpack.c.l.b16 %v69
    %v141 = vunpack.c.l.b16 %v70
    %v142 = vunpack.c.l.b16 %v71
    %v143 = vunpack.c.l.b16 %v72
    %v144 = vunpack.c.l.b16 %v73
    %v145 = vunpack.c.l.b16 %v74
    %v146 = vunpack.c.l.b16 %v75
    %v147 = vunpack.c.l.b16 %v76
    %v148 = vunpack.c.l.b16 %v77
    %v149 = vunpack.c.l.b16 %v78
    %v150 = vunpack.c.l.b16 %v79
    %v151 = vunpack.c.l.b16 %v80
    %v152 = vunpack.c.l.b16 %v81
    %v153 = vunpack.c.l.b16 %v82
    %v154 = vunpack.c.l.b16 %v83
    %v155 = vunpack.c.l.b16 %v84
    %v156 = vunpack.c.l.b16 %v85
    %v157 = vunpack.c.l.b16 %v86
    %v158 = vunpack.c.l.b16 %v87
    %v159 = vunpack.c.l.b16 %v88
    %v160 = vunpack.c.l.b16 %v89
    %v161 = vunpack.c.l.b16 %v90
    %v162 = vunpack.c.l.b16 %v91
    %v163 = vunpack.c.l.b16 %v92
    %v164 = vunpack.c.l.b16 %v93
    %v165 = vpack.c.b16 %v134, %v133
    %v166 = vpack.c.b16 %v136, %v135
    %v167 = vpack.c.b16 %v138, %v137
    %v168 = vpack.c.b16 %v140, %v139
    %v169 = vpack.c.b16 %v142, %v141
    %v170 = vpack.c.b16 %v144, %v143
    %v171 = vpack.c.b16 %v146, %v145
    %v172 = vpack.c.b16 %v148, %v147
    %v173 = vpack.c.b16 %v150, %v149
    %v174 = vpack.c.b16 %v152, %v151
    %v175 = vpack.c.b16 %v154, %v153
    %v176 = vpack.c.b16 %v156, %v155
    %v177 = vpack.c.b16 %v158, %v157
    %v178 = vpack.c.b16 %v160, %v159
    %v179 = vpack.c.b16 %v162, %v161
    %v180 = vpack.c.b16 %v164, %v163
    %197 = vmatprep.subr.bf16.mxu0 0
    %198 = vmatpush1.bf16.msra.mxu0 %v172
    %199 = vmatprep.subr.bf16.mxu0 0
    %200 = vmatpush1.bf16.msra.mxu0 %v171
    %201 = vmatprep.subr.bf16.mxu0 0
    %202 = vmatpush1.bf16.msra.mxu0 %v170
    %203 = vmatprep.subr.bf16.mxu0 0
    %204 = vmatpush1.bf16.msra.mxu0 %v169
    %205 = vmatprep.subr.bf16.mxu0 0
    %206 = vmatpush1.bf16.msra.mxu0 %v168
    %207 = vmatprep.subr.bf16.mxu0 0
    %208 = vmatpush1.bf16.msra.mxu0 %v167
    %209 = vmatprep.subr.bf16.mxu0 0
    %210 = vmatpush1.bf16.msra.mxu0 %v166
    %211 = vmatprep.subr.bf16.mxu0 0
    %212 = vmatpush1.bf16.msra.mxu0 %v165
    %213 = vmatprep.subr.bf16.mxu0 0
    %214 = vmatpush2.bf16.msra.mxu0 %v180
    %215 = vmatprep.subr.bf16.mxu0 0
    %216 = vmatpush2.bf16.msra.mxu0 %v179
    %217 = vmatprep.subr.bf16.mxu0 0
    %218 = vmatpush2.bf16.msra.mxu0 %v178
    %219 = vmatprep.subr.bf16.mxu0 0
    %220 = vmatpush2.bf16.msra.mxu0 %v177
    %221 = vmatprep.subr.bf16.mxu0 0
    %222 = vmatpush2.bf16.msra.mxu0 %v176
    %223 = vmatprep.subr.bf16.mxu0 0
    %224 = vmatpush2.bf16.msra.mxu0 %v175
    %225 = vmatprep.subr.bf16.mxu0 0
    %226 = vmatpush2.bf16.msra.mxu0 %v174
    %227 = vmatprep.subr.bf16.mxu0 0
    %228 = vmatpush2.bf16.msra.mxu0 %v173
    %229 = vmatprep.mubr.bf16.mxu0 %v61
    %230 = vmatmul.mubr.bf16.gmra.mxu0 %v60
    %v231 = vpop.f32.mrf.mxu0
    %v232 = vadd.f32 %v99, %v231
    %v233 = vpop.f32.mrf.mxu0
    %v234 = vpop.f32.mrf.mxu0
    %v235 = vpop.f32.mrf.mxu0
    %236 = vdwg.mxu0
    %vm237 = vcmp.ge.f32.partialorder %v232, 0.0
    %v238 = vmul.f32 %v232, 0.01
    %v239 = vsel %vm237, %v232, %v238
    %v240 = vpack.c.bf16 %v239, %v239
    %v241 = vld [vmem:[%s3] sm:$0xf]
    %v242 = vld [vmem:[%s3 + $0x4] sm:$0xf]
    %v243 = vld [vmem:[%s3 + $0x8] sm:$0xf]
    %v244 = vld [vmem:[%s3 + $0xc] sm:$0xf]
    %v245 = vld [vmem:[%s3 + $0x10] sm:$0xf]
    %v246 = vld [vmem:[%s3 + $0x14] sm:$0xf]
    %v247 = vld [vmem:[%s3 + $0x18] sm:$0xf]
    %v248 = vld [vmem:[%s3 + $0x1c] sm:$0xf]
    %v249 = vld [vmem:[%s3 + $0x20] sm:$0xf]
    %v250 = vld [vmem:[%s3 + $0x24] sm:$0xf]
    %v251 = vld [vmem:[%s3 + $0x28] sm:$0xf]
    %v252 = vld [vmem:[%s3 + $0x2c] sm:$0xf]
    %v253 = vld [vmem:[%s3 + $0x30] sm:$0xf]
    %v254 = vld [vmem:[%s3 + $0x34] sm:$0xf]
    %v255 = vld [vmem:[%s3 + $0x38] sm:$0xf]
    %v256 = vld [vmem:[%s3 + $0x3c] sm:$0xf]
    %v257 = vld [vmem:[%s4] sm:$0x1]
    %v259 = vlaneseq
    %v260 = vshrl.u32 %v259, 7
    %v261 = vsub.s32 0, %v260
    %v262 = vrot.slane %v257, %v261
    %v280 = vunpack.c.l.b16 %v241
    %v281 = vunpack.c.l.b16 %v242
    %v282 = vunpack.c.l.b16 %v243
    %v283 = vunpack.c.l.b16 %v244
    %v284 = vunpack.c.l.b16 %v245
    %v285 = vunpack.c.l.b16 %v246
    %v286 = vunpack.c.l.b16 %v247
    %v287 = vunpack.c.l.b16 %v248
    %v288 = vunpack.c.l.b16 %v249
    %v289 = vunpack.c.l.b16 %v250
    %v290 = vunpack.c.l.b16 %v251
    %v291 = vunpack.c.l.b16 %v252
    %v292 = vunpack.c.l.b16 %v253
    %v293 = vunpack.c.l.b16 %v254
    %v294 = vunpack.c.l.b16 %v255
    %v295 = vunpack.c.l.b16 %v256
    %v296 = vpack.c.b16 %v281, %v280
    %v297 = vpack.c.b16 %v283, %v282
    %v298 = vpack.c.b16 %v285, %v284
    %v299 = vpack.c.b16 %v287, %v286
    %v300 = vpack.c.b16 %v289, %v288
    %v301 = vpack.c.b16 %v291, %v290
    %v302 = vpack.c.b16 %v293, %v292
    %v303 = vpack.c.b16 %v295, %v294
    %312 = vmatprep.subr.bf16.mxu0 0
    %313 = vmatpush1.bf16.msra.mxu0 %v303
    %314 = vmatprep.subr.bf16.mxu0 0
    %315 = vmatpush1.bf16.msra.mxu0 %v302
    %316 = vmatprep.subr.bf16.mxu0 0
    %317 = vmatpush1.bf16.msra.mxu0 %v301
    %318 = vmatprep.subr.bf16.mxu0 0
    %319 = vmatpush1.bf16.msra.mxu0 %v300
    %320 = vmatprep.subr.bf16.mxu0 0
    %321 = vmatpush1.bf16.msra.mxu0 %v299
    %322 = vmatprep.subr.bf16.mxu0 0
    %323 = vmatpush1.bf16.msra.mxu0 %v298
    %324 = vmatprep.subr.bf16.mxu0 0
    %325 = vmatpush1.bf16.msra.mxu0 %v297
    %326 = vmatprep.subr.bf16.mxu0 0
    %327 = vmatpush1.bf16.msra.mxu0 %v296
    %328 = vmatprep.subr.bf16.mxu0 0
    %329 = vmatpush2.bf16.msra.mxu0 0
    %330 = vmatprep.subr.bf16.mxu0 0
    %331 = vmatpush2.bf16.msra.mxu0 0
    %332 = vmatprep.subr.bf16.mxu0 0
    %333 = vmatpush2.bf16.msra.mxu0 0
    %334 = vmatprep.subr.bf16.mxu0 0
    %335 = vmatpush2.bf16.msra.mxu0 0
    %336 = vmatprep.subr.bf16.mxu0 0
    %337 = vmatpush2.bf16.msra.mxu0 0
    %338 = vmatprep.subr.bf16.mxu0 0
    %339 = vmatpush2.bf16.msra.mxu0 0
    %340 = vmatprep.subr.bf16.mxu0 0
    %341 = vmatpush2.bf16.msra.mxu0 0
    %342 = vmatprep.subr.bf16.mxu0 0
    %343 = vmatpush2.bf16.msra.mxu0 0
    %344 = vmatprep.mubr.bf16.mxu0 0
    %345 = vmatmul.mubr.bf16.gmra.mxu0 %v240
    %v346 = vpop.f32.mrf.mxu0
    %v347 = vadd.f32 %v262, %v346
    %v348 = vpop.f32.mrf.mxu0
    %v349 = vpop.f32.mrf.mxu0
    %v350 = vpop.f32.mrf.mxu0
    %351 = vdwg.mxu0
    %vm352 = vcmp.ge.f32.partialorder %v347, 0.0
    %v353 = vmul.f32 %v347, 0.01
    %v354 = vsel %vm352, %v347, %v353
    %v355 = vpack.c.bf16 %v354, %v354
    %v356 = vld [vmem:[%s5] sm:$0xf]
    %v357 = vld [vmem:[%s5 + $0x4] sm:$0xf]
    %v358 = vld [vmem:[%s5 + $0x8] sm:$0xf]
    %v359 = vld [vmem:[%s5 + $0xc] sm:$0xf]
    %v360 = vld [vmem:[%s5 + $0x10] sm:$0xf]
    %v361 = vld [vmem:[%s5 + $0x14] sm:$0xf]
    %v362 = vld [vmem:[%s5 + $0x18] sm:$0xf]
    %v363 = vld [vmem:[%s5 + $0x1c] sm:$0xf]
    %v364 = vld [vmem:[%s5 + $0x20] sm:$0xf]
    %v365 = vld [vmem:[%s5 + $0x24] sm:$0xf]
    %v366 = vld [vmem:[%s5 + $0x28] sm:$0xf]
    %v367 = vld [vmem:[%s5 + $0x2c] sm:$0xf]
    %v368 = vld [vmem:[%s5 + $0x30] sm:$0xf]
    %v369 = vld [vmem:[%s5 + $0x34] sm:$0xf]
    %v370 = vld [vmem:[%s5 + $0x38] sm:$0xf]
    %v371 = vld [vmem:[%s5 + $0x3c] sm:$0xf]
    %v372 = vld [vmem:[%s6] sm:$0x1]
    %v374 = vlaneseq
    %v375 = vshrl.u32 %v374, 7
    %v376 = vsub.s32 0, %v375
    %v377 = vrot.slane %v372, %v376
    %v395 = vunpack.c.l.b16 %v356
    %v396 = vunpack.c.l.b16 %v357
    %v397 = vunpack.c.l.b16 %v358
    %v398 = vunpack.c.l.b16 %v359
    %v399 = vunpack.c.l.b16 %v360
    %v400 = vunpack.c.l.b16 %v361
    %v401 = vunpack.c.l.b16 %v362
    %v402 = vunpack.c.l.b16 %v363
    %v403 = vunpack.c.l.b16 %v364
    %v404 = vunpack.c.l.b16 %v365
    %v405 = vunpack.c.l.b16 %v366
    %v406 = vunpack.c.l.b16 %v367
    %v407 = vunpack.c.l.b16 %v368
    %v408 = vunpack.c.l.b16 %v369
    %v409 = vunpack.c.l.b16 %v370
    %v410 = vunpack.c.l.b16 %v371
    %v411 = vpack.c.b16 %v396, %v395
    %v412 = vpack.c.b16 %v398, %v397
    %v413 = vpack.c.b16 %v400, %v399
    %v414 = vpack.c.b16 %v402, %v401
    %v415 = vpack.c.b16 %v404, %v403
    %v416 = vpack.c.b16 %v406, %v405
    %v417 = vpack.c.b16 %v408, %v407
    %v418 = vpack.c.b16 %v410, %v409
    %427 = vmatprep.subr.bf16.mxu0 0
    %428 = vmatpush1.bf16.msra.mxu0 %v418
    %429 = vmatprep.subr.bf16.mxu0 0
    %430 = vmatpush1.bf16.msra.mxu0 %v417
    %431 = vmatprep.subr.bf16.mxu0 0
    %432 = vmatpush1.bf16.msra.mxu0 %v416
    %433 = vmatprep.subr.bf16.mxu0 0
    %434 = vmatpush1.bf16.msra.mxu0 %v415
    %435 = vmatprep.subr.bf16.mxu0 0
    %436 = vmatpush1.bf16.msra.mxu0 %v414
    %437 = vmatprep.subr.bf16.mxu0 0
    %438 = vmatpush1.bf16.msra.mxu0 %v413
    %439 = vmatprep.subr.bf16.mxu0 0
    %440 = vmatpush1.bf16.msra.mxu0 %v412
    %441 = vmatprep.subr.bf16.mxu0 0
    %442 = vmatpush1.bf16.msra.mxu0 %v411
    %443 = vmatprep.subr.bf16.mxu0 0
    %444 = vmatpush2.bf16.msra.mxu0 0
    %445 = vmatprep.subr.bf16.mxu0 0
    %446 = vmatpush2.bf16.msra.mxu0 0
    %447 = vmatprep.subr.bf16.mxu0 0
    %448 = vmatpush2.bf16.msra.mxu0 0
    %449 = vmatprep.subr.bf16.mxu0 0
    %450 = vmatpush2.bf16.msra.mxu0 0
    %451 = vmatprep.subr.bf16.mxu0 0
    %452 = vmatpush2.bf16.msra.mxu0 0
    %453 = vmatprep.subr.bf16.mxu0 0
    %454 = vmatpush2.bf16.msra.mxu0 0
    %455 = vmatprep.subr.bf16.mxu0 0
    %456 = vmatpush2.bf16.msra.mxu0 0
    %457 = vmatprep.subr.bf16.mxu0 0
    %458 = vmatpush2.bf16.msra.mxu0 0
    %459 = vmatprep.mubr.bf16.mxu0 0
    %460 = vmatmul.mubr.bf16.gmra.mxu0 %v355
    %v461 = vpop.f32.mrf.mxu0
    %v462 = vadd.f32 %v377, %v461
    %v463 = vpop.f32.mrf.mxu0
    %v464 = vpop.f32.mrf.mxu0
    %v465 = vpop.f32.mrf.mxu0
    %466 = vdwg.mxu0
    %vm467 = vcmp.ge.f32.partialorder %v462, 0.0
    %v468 = vmul.f32 %v462, 0.01
    %v469 = vsel %vm467, %v462, %v468
    %v470 = vpack.c.bf16 %v469, %v469
    %v471 = vld [vmem:[%s7] sm:$0xf]
    %v472 = vld [vmem:[%s7 + $0x4] sm:$0xf]
    %v473 = vld [vmem:[%s7 + $0x8] sm:$0xf]
    %v474 = vld [vmem:[%s7 + $0xc] sm:$0xf]
    %v475 = vld [vmem:[%s7 + $0x10] sm:$0xf]
    %v476 = vld [vmem:[%s7 + $0x14] sm:$0xf]
    %v477 = vld [vmem:[%s7 + $0x18] sm:$0xf]
    %v478 = vld [vmem:[%s7 + $0x1c] sm:$0xf]
    %v479 = vld [vmem:[%s8] sm:$0x1]
    %v481 = vlaneseq
    %v482 = vshrl.u32 %v481, 7
    %v483 = vsub.s32 0, %v482
    %v484 = vrot.slane %v479, %v483
    %v494 = vunpack.c.l.b16 %v471
    %v495 = vunpack.c.l.b16 %v472
    %v496 = vunpack.c.l.b16 %v473
    %v497 = vunpack.c.l.b16 %v474
    %v498 = vunpack.c.l.b16 %v475
    %v499 = vunpack.c.l.b16 %v476
    %v500 = vunpack.c.l.b16 %v477
    %v501 = vunpack.c.l.b16 %v478
    %v502 = vpack.c.b16 %v495, %v494
    %v503 = vpack.c.b16 %v497, %v496
    %v504 = vpack.c.b16 %v499, %v498
    %v505 = vpack.c.b16 %v501, %v500
    %vm510 = vcmask 523264
    %v512 = vsel %vm510, %v470, 0
    %514 = vmatprep.subr.bf16.mxu0 0
    %515 = vmatpush1.bf16.msra.mxu0 0
    %516 = vmatprep.subr.bf16.mxu0 0
    %517 = vmatpush1.bf16.msra.mxu0 0
    %518 = vmatprep.subr.bf16.mxu0 0
    %519 = vmatpush1.bf16.msra.mxu0 0
    %520 = vmatprep.subr.bf16.mxu0 0
    %521 = vmatpush1.bf16.msra.mxu0 0
    %522 = vmatprep.subr.bf16.mxu0 0
    %523 = vmatpush1.bf16.msra.mxu0 %v505
    %524 = vmatprep.subr.bf16.mxu0 0
    %525 = vmatpush1.bf16.msra.mxu0 %v504
    %526 = vmatprep.subr.bf16.mxu0 0
    %527 = vmatpush1.bf16.msra.mxu0 %v503
    %528 = vmatprep.subr.bf16.mxu0 0
    %529 = vmatpush1.bf16.msra.mxu0 %v502
    %530 = vmatprep.subr.bf16.mxu0 0
    %531 = vmatpush2.bf16.msra.mxu0 0
    %532 = vmatprep.subr.bf16.mxu0 0
    %533 = vmatpush2.bf16.msra.mxu0 0
    %534 = vmatprep.subr.bf16.mxu0 0
    %535 = vmatpush2.bf16.msra.mxu0 0
    %536 = vmatprep.subr.bf16.mxu0 0
    %537 = vmatpush2.bf16.msra.mxu0 0
    %538 = vmatprep.subr.bf16.mxu0 0
    %539 = vmatpush2.bf16.msra.mxu0 0
    %540 = vmatprep.subr.bf16.mxu0 0
    %541 = vmatpush2.bf16.msra.mxu0 0
    %542 = vmatprep.subr.bf16.mxu0 0
    %543 = vmatpush2.bf16.msra.mxu0 0
    %544 = vmatprep.subr.bf16.mxu0 0
    %545 = vmatpush2.bf16.msra.mxu0 0
    %546 = vmatprep.mubr.bf16.mxu0 0
    %547 = vmatmul.mubr.bf16.gmra.mxu0 %v512
    %v548 = vpop.f32.mrf.mxu0
    %v549 = vadd.f32 %v484, %v548
    %v550 = vpop.f32.mrf.mxu0
    %v551 = vpop.f32.mrf.mxu0
    %v552 = vpop.f32.mrf.mxu0
    %553 = vdwg.mxu0
    %554 = vst [vmem:[#allocation5] sm:$0x3] %v549
    // Predicated region
    $region42: #{tpu_custom_call.1} parent=1 // pred_check
      _
    $region43: #{tpu_custom_call.1} parent=1 // pred_check_branch
      %556 = sbr.rel (0) target = $region45
    $region44: #{tpu_custom_call.1} parent=1 // pred_region
      %s558 = ssub.s32 32, 32
      %559 = vsyncadd [#allocation4], %s558
      %s561 = sshll.u32 [#allocation5], 4
      %s562 = int_to_ptr.vmem [resolvable:$true] %s561
      %564 = dma.vmem_to_hbm [thread:$0]  %s562, 32, %s9, [#allocation4]
    $region45: #{tpu_custom_call.1} parent=1 // pred_fallthru
      _
    // Predicated region
    $region46: #{tpu_custom_call.1} parent=1 // pred_check
      _
    $region47: #{tpu_custom_call.1} parent=1 // pred_check_branch
      %566 = sbr.rel (0) target = $region49
    $region48: #{tpu_custom_call.1} parent=1 // pred_region
      %567 = dma.done [#allocation4], 32
    $region49: #{tpu_custom_call.1} parent=1 // pred_fallthru
      _
    %568 = vsyncpa [#allocation3], 1
    %569 = vsyncpa [#allocation4], 1

</llo_original>
